<compile_context>
chip_gen: v5e
topology: v5e:2x2
jax: 0.10.0
libtpu: 0.0.40
codegen_flags: <defaults>
</compile_context>

<pallas_src>
import jax
import jax.numpy as jnp
from jax.experimental import pallas as pl
from jax.experimental.pallas import tpu as pltpu


def _attention_kernel(x_ref, o_ref):
    """Block: (bt, C, HW).  Rows (b, c) are independent except for the channel
    softmax, which reduces over axis=1 within each batch element."""
    x = x_ref[...]                                                    # native dtype

    # ---- channel attention: AvgPool2d((H, W)) -> softmax over C (axis=1) ----
    # Mean accumulates in fp32 without materializing an fp32 copy of x.
    ch_mean = jnp.mean(x, axis=2, keepdims=True, dtype=jnp.float32)   # (bt, C, 1)
    ch_max = jnp.max(ch_mean, axis=1, keepdims=True)                  # (bt, 1, 1)
    ch_exp = jnp.exp(ch_mean - ch_max)                                # (bt, C, 1)
    ca = ch_exp / jnp.sum(ch_exp, axis=1, keepdims=True)              # exact divide

    # ---- spatial softmax over the flattened spatial (lane) axis ----
    sp_max = jnp.max(x, axis=2, keepdims=True).astype(jnp.float32)    # (bt, C, 1)
    # Row-sum of exp; the exp feeds the reduction directly (short live range,
    # no full-tile fp32 temporary) and is recomputed in the output pass below.
    sp_sum = jnp.sum(jnp.exp(x.astype(jnp.float32) - sp_max),
                     axis=2, keepdims=True)                           # (bt, C, 1)

    # Fold the channel weight and spatial normalization into a single small
    # (bt, C, 1) scale so the big tile is swept exactly once on the way out.
    scale = ca / sp_sum                                               # (bt, C, 1)
    o_ref[...] = (jnp.exp(x.astype(jnp.float32) - sp_max) * scale).astype(o_ref.dtype)


def _round_up(n, m):
    return -(-n // m) * m


def _vmem_limit_bytes():
    """Scoped-VMEM limit with headroom: ~80% of physical capacity, capped at
    100 MiB (v5e/v6e have 128 MiB physical, v7x only 64 MiB)."""
    cap = 64 << 20  # conservative default (v7x) if the query is unavailable
    try:
        cap = int(getattr(pltpu.get_tpu_info(), "vmem_capacity_bytes", cap))
    except Exception:
        pass
    return int(max(32 << 20, min(int(cap * 0.8), 100 << 20)))


def attention_forward(x):
    """x: (B, C, H, W) NCHW (matching the PyTorch module). Returns same shape."""
    B, C, H, W = x.shape
    HW = H * W
    x_flat = x.reshape(B, C, HW)

    itemsize = jnp.dtype(x.dtype).itemsize
    sublane = 32 // itemsize                 # 8 for f32, 16 for bf16, 32 for int8
    c_pad = _round_up(C, sublane)            # VMEM sublane padding of each (C, HW) slab
    hw_pad = _round_up(HW, 128)              # VMEM lane padding
    # TODO(synk): when HW % 128 != 0 the output store degrades to masked
    # vst.msk; a padded-HW layout with in-kernel masking (without an extra XLA
    # pad pass over HBM) would keep stores lane-dense for 7x7/14x14/... levels.
    # TODO(synk): when C < sublane, folding batch into the sublane axis
    # ((B*C, HW) blocks) would remove the remaining VMEM/vreg padding waste.

    per_batch_vmem = c_pad * hw_pad * itemsize      # one batch in one VMEM buffer (padded)
    per_batch_hbm = C * HW * itemsize               # useful bytes actually moved

    def vmem_need(bt):
        # double-buffered input + output blocks, plus an allowance for one
        # transient fp32 tile inside the body, plus misc scratch.
        return 4 * bt * per_batch_vmem + bt * c_pad * hw_pad * 4 + (1 << 20)

    vmem_limit = _vmem_limit_bytes()
    budget = vmem_limit - (2 << 20)          # headroom for compiler-internal scratch

    def steps(bt):
        return pl.cdiv(B, bt)

    fits = [b for b in range(1, B + 1) if vmem_need(b) <= budget]
    if not fits:
        # TODO(synk): for very large C*HW a single batch does not fit VMEM;
        # this needs an HW-split grid axis with an online-softmax accumulator.
        bt = 1
    else:
        # Prefer >=4 total grid steps (>=2 per TensorCore) once blocks are past
        # the ~1 MiB HBM-roofline knee; else keep >=2 steps; else biggest block.
        big = [b for b in fits if steps(b) >= 4 and b * per_batch_hbm >= (1 << 20)]
        multi = [b for b in fits if steps(b) >= 2]
        bt = max(big) if big else (max(multi) if multi else max(fits))

    grid = (steps(bt),)   # cdiv: boundary blocks are padded; padded rows are
                          # independent, so their garbage never contaminates
                          # valid outputs and their stores are discarded.

    cost = pl.CostEstimate(
        flops=6 * B * C * HW,
        transcendentals=2 * B * C * HW + B * C,   # exp recomputed in output pass
        bytes_accessed=2 * B * C * HW * itemsize,
    )

    out_flat = pl.pallas_call(
        _attention_kernel,
        out_shape=jax.ShapeDtypeStruct((B, C, HW), x.dtype),
        grid_spec=pl.GridSpec(
            grid=grid,
            in_specs=[pl.BlockSpec((bt, C, HW), lambda b: (b, 0, 0))],
            out_specs=pl.BlockSpec((bt, C, HW), lambda b: (b, 0, 0)),
        ),
        compiler_params=pltpu.CompilerParams(
            dimension_semantics=("parallel",),
            vmem_limit_bytes=vmem_limit,
        ),
        cost_estimate=cost,
    )(x_flat)

    return out_flat.reshape(B, C, H, W)


def attention_reference(x):
    """Pure-JAX reference mirroring the PyTorch forward."""
    B, C, H, W = x.shape
    ca = jnp.mean(x, axis=(2, 3), keepdims=True)        # AvgPool2d((H,W)) -> (B,C,1,1)
    ca = jax.nn.softmax(ca, axis=1)                      # softmax over channels
    sa = jax.nn.softmax(x.reshape(B, C, H * W), axis=2)  # softmax over flattened spatial
    sa = sa.reshape(B, C, H, W)
    return sa * ca


if __name__ == "__main__":
    key = jax.random.PRNGKey(0)
    B, C, H, W = 2, 4, 16, 16
    x = jax.random.normal(key, (B, C, H, W), dtype=jnp.float32)

    out = jax.block_until_ready(attention_forward(x))
    ref = attention_reference(x)

    assert out.shape == (B, C, H, W)
    assert jnp.allclose(out, ref, atol=1e-5, rtol=1e-5), "mismatch vs reference"

    print("KERNEL_OK")
</pallas_src>

<mosaic_0001>
module attributes {stable_mosaic.version = 11 : i64} {
  func.func @_attention_kernel(%arg0: i32, %arg1: memref<1x4x256xf32, #tpu.memory_space<vmem>>, %arg2: memref<1x4x256xf32, #tpu.memory_space<vmem>>) attributes {dimension_semantics = [#tpu.dimension_semantics<parallel>], iteration_bounds = array<i64: 2>, scalar_prefetch = 0 : i64, scratch_operands = 0 : i64, tpu.core_type = #tpu.core_type<tc>, window_params = [{transform_indices = @transform_0, window_bounds = array<i64: 1, 4, 256>}, {transform_indices = @transform_1, window_bounds = array<i64: 1, 4, 256>}]} {
    %c0 = arith.constant 0 : index
    %c0_0 = arith.constant 0 : index
    %c0_1 = arith.constant 0 : index
    %0 = vector.load %arg1[%c0, %c0_0, %c0_1] : memref<1x4x256xf32, #tpu.memory_space<vmem>>, vector<1x4x256xf32>
    %cst = arith.constant dense<0.000000e+00> : vector<1x4xf32>
    %1 = vector.multi_reduction <add>, %0, %cst [2] : vector<1x4x256xf32> to vector<1x4xf32>
    %2 = vector.shape_cast %1 : vector<1x4xf32> to vector<1x4x1xf32>
    %cst_2 = arith.constant 2.560000e+02 : f32
    %3 = vector.broadcast %cst_2 : f32 to vector<1x4x1xf32>
    %4 = arith.divf %2, %3 : vector<1x4x1xf32>
    %cst_3 = arith.constant dense<0xFF800000> : vector<1x1xf32>
    %5 = vector.multi_reduction <maximumf>, %4, %cst_3 [1] : vector<1x4x1xf32> to vector<1x1xf32>
    %6 = vector.shape_cast %5 : vector<1x1xf32> to vector<1x1x1xf32>
    %7 = vector.broadcast %6 : vector<1x1x1xf32> to vector<1x4x1xf32>
    %8 = arith.subf %4, %7 : vector<1x4x1xf32>
    %9 = math.exp %8 : vector<1x4x1xf32>
    %cst_4 = arith.constant dense<0.000000e+00> : vector<1x1xf32>
    %10 = vector.multi_reduction <add>, %9, %cst_4 [1] : vector<1x4x1xf32> to vector<1x1xf32>
    %11 = vector.shape_cast %10 : vector<1x1xf32> to vector<1x1x1xf32>
    %12 = vector.broadcast %11 : vector<1x1x1xf32> to vector<1x4x1xf32>
    %13 = arith.divf %9, %12 : vector<1x4x1xf32>
    %cst_5 = arith.constant dense<0xFF800000> : vector<1x4xf32>
    %14 = vector.multi_reduction <maximumf>, %0, %cst_5 [2] : vector<1x4x256xf32> to vector<1x4xf32>
    %15 = vector.shape_cast %14 : vector<1x4xf32> to vector<1x4x1xf32>
    %16 = vector.broadcast %15 : vector<1x4x1xf32> to vector<1x4x256xf32>
    %17 = arith.subf %0, %16 : vector<1x4x256xf32>
    %18 = math.exp %17 : vector<1x4x256xf32>
    %cst_6 = arith.constant dense<0.000000e+00> : vector<1x4xf32>
    %19 = vector.multi_reduction <add>, %18, %cst_6 [2] : vector<1x4x256xf32> to vector<1x4xf32>
    %20 = vector.shape_cast %19 : vector<1x4xf32> to vector<1x4x1xf32>
    %21 = arith.divf %13, %20 : vector<1x4x1xf32>
    %22 = vector.broadcast %15 : vector<1x4x1xf32> to vector<1x4x256xf32>
    %23 = arith.subf %0, %22 : vector<1x4x256xf32>
    %24 = math.exp %23 : vector<1x4x256xf32>
    %25 = vector.broadcast %21 : vector<1x4x1xf32> to vector<1x4x256xf32>
    %26 = arith.mulf %24, %25 : vector<1x4x256xf32>
    %c0_7 = arith.constant 0 : index
    %c0_8 = arith.constant 0 : index
    %c0_9 = arith.constant 0 : index
    %27 = vector.load %arg2[%c0_7, %c0_8, %c0_9] : memref<1x4x256xf32, #tpu.memory_space<vmem>>, vector<1x4x256xf32>
    tpu.vector_store %arg2[%c0_7, %c0_8, %c0_9], %26 {strides = array<i32>} : memref<1x4x256xf32, #tpu.memory_space<vmem>>, vector<1x4x256xf32>,
    return
  }
  func.func @transform_0(%arg0: i32) -> (i32, i32, i32) {
    %c0_i32 = arith.constant 0 : i32
    %c0_i32_0 = arith.constant 0 : i32
    %c0_i32_1 = arith.constant 0 : i32
    return %arg0, %c0_i32, %c0_i32_0 : i32, i32, i32
  }
  func.func @transform_1(%arg0: i32) -> (i32, i32, i32) {
    %c0_i32 = arith.constant 0 : i32
    %c0_i32_0 = arith.constant 0 : i32
    %c0_i32_1 = arith.constant 0 : i32
    return %arg0, %c0_i32, %c0_i32_0 : i32, i32, i32
  }
}

</mosaic_0001>

<llo_original>
// kernel: tpu_custom_call.1
$region0: #{tpu_custom_call.1}
  #allocation0 [shape = 'u32[]', space=smem, size = 0x4, offset = 0x4, fixed_abs, tag = 'smem constant byte address 0x4 - core index']
  #allocation1 [shape = 'u32[72,128]{1,0:T(1,128)}', space=vmem, size = 0x9000, scoped, tag = 'internal scratch']
  %s0 = inlined_call_operand.hbm [shape: f32[2,4,256], index: 0, kind: input, shape index: {}]
  %s1 = inlined_call_operand.hbm [shape: f32[2,4,256], index: 1, kind: output, shape index: {}]
  %s2 = sld [smem:[#allocation0]]
  $region41: #{tpu_custom_call.1} parent=0
    _
  %s4 = ssub.s32 1, %s2
  %s5 = scalar_select 0, %s4, %s2
  $region1: #{tpu_custom_call.1} parent=0
    #allocation2 [shape = 'u8[8192]{0}', space=vmem, size = 0x2000, scoped, tag = 'input window, operand 0']
    #allocation3 [shape = 's32[2]{0}', space=sflag, size = 0x8, scoped, tag = 'scoped memory for tpu_custom_call.1']
    #allocation4 [shape = 's32[2]{0}', space=sflag, size = 0x8, scoped, tag = 'scoped memory for tpu_custom_call.1']
    #allocation5 [shape = 'u8[8192]{0}', space=vmem, size = 0x2000, scoped, tag = 'output window, operand 0']
    %6 = vsyncpa [#allocation3], 0
    %s7 = scalar_lea.sflag [#allocation3], 1
    %8 = vsyncpa %s7, 0
    %9 = vsyncpa [#allocation4], 0
    %s10 = scalar_lea.sflag [#allocation4], 1
    %11 = vsyncpa %s10, 0
    loop: start=0, step=1, limit=4
    $region2: #{tpu_custom_call.1} parent=1 // loop_pre_header
      _
    $region3: #{tpu_custom_call.1} parent=1 // loop_header
      %s13 = sphi 0, %s17
      %p14 = scmp.ge.s32.totalorder %s13, 4
      %s23 = sphi 0, %s25
      %s26 = sphi 0, %s23
      %s27 = sphi 0, %s26
      %s43 = sphi 0, %s27
      %s49 = sphi 0, %s51
      %s52 = sphi 0, %s49
      %s53 = sphi 0, %s52
      %s69 = sphi 0, %s53
    $region4: #{tpu_custom_call.1} parent=1 // loop_header_branch
      %16 = sbr.rel (%p14) target = $region8
    $region5: #{tpu_custom_call.1} parent=1 // loop_body
      %s18 = ssub.s32 %s13, 1
      %s19 = ssub.s32 %s13, 2
      %s20 = sadd.s32 %s13, 1
      %s21 = ssub.s32 %s13, %s20
      %p22 = scmp.eq.s32.totalorder %s21, 0
      %s24 = sadd.s32 %s23, 1
      %s25 = scalar_select %p22, %s23, %s24
      %p28 = pneg %p22
      %p29 = scmp.eq.s32.totalorder %s13, 1
      %p30 = por %p28, %p29
      %p31 = scmp.ne.s32.totalorder %s23, %s26
      %p32 = scmp.eq.s32.totalorder %s13, 0
      %p33 = por %p31, %p32
      %p34 = scmp.ne.s32.totalorder %s23, %s26
      %p35 = scmp.eq.s32.totalorder %s18, 1
      %p36 = por %p34, %p35
      %p37 = scmp.ne.s32.totalorder %s26, %s27
      %p38 = scmp.eq.s32.totalorder %s18, 0
      %p39 = por %p37, %p38
      %p40 = scmp.ne.s32.totalorder %s26, %s27
      %p41 = scmp.eq.s32.totalorder %s19, 1
      %p42 = por %p40, %p41
      %p44 = scmp.ne.s32.totalorder %s27, %s43
      %p45 = scmp.eq.s32.totalorder %s19, 0
      %p46 = por %p44, %p45
      %s47 = ssub.s32 %s13, %s20
      %p48 = scmp.eq.s32.totalorder %s47, 0
      %s50 = sadd.s32 %s49, 1
      %s51 = scalar_select %p48, %s49, %s50
      %p54 = pneg %p48
      %p55 = scmp.eq.s32.totalorder %s13, 1
      %p56 = por %p54, %p55
      %p57 = scmp.ne.s32.totalorder %s49, %s52
      %p58 = scmp.eq.s32.totalorder %s13, 0
      %p59 = por %p57, %p58
      %p60 = scmp.ne.s32.totalorder %s49, %s52
      %p61 = scmp.eq.s32.totalorder %s18, 1
      %p62 = por %p60, %p61
      %p63 = scmp.ne.s32.totalorder %s52, %s53
      %p64 = scmp.eq.s32.totalorder %s18, 0
      %p65 = por %p63, %p64
      %p66 = scmp.ne.s32.totalorder %s52, %s53
      %p67 = scmp.eq.s32.totalorder %s19, 1
      %p68 = por %p66, %p67
      %p70 = scmp.ne.s32.totalorder %s53, %s69
      %p71 = scmp.eq.s32.totalorder %s19, 0
      %p72 = por %p70, %p71
      %p73 = scmp.le.s32.totalorder 1, %s13
      %p74 = scmp.lt.s32.totalorder %s13, 3
      %p75 = pnand %p73, %p74
      %p76 = pneg %p75
      // Predicated region
      $region9: #{tpu_custom_call.1} parent=5 // pred_check
        _
      $region10: #{tpu_custom_call.1} parent=5 // pred_check_branch
        %78 = sbr.rel (%p75) target = $region12
      $region11: #{tpu_custom_call.1} parent=5 // pred_region
        %s79 = ssub.s32 %s13, 1
      $region12: #{tpu_custom_call.1} parent=5 // pred_fallthru
        _
      %p80 = scmp.lt.s32.totalorder %s13, 2
      // Predicated region
      $region13: #{tpu_custom_call.1} parent=5 // pred_check
        %p81 = pneg %p80
      $region14: #{tpu_custom_call.1} parent=5 // pred_check_branch
        %83 = sbr.rel (%p81) target = $region16
      $region15: #{tpu_custom_call.1} parent=5 // pred_region
        // Predicated region
        $region17: #{tpu_custom_call.1} parent=15 // pred_check
          %p84 = pneg %p33
        $region18: #{tpu_custom_call.1} parent=15 // pred_check_branch
          %86 = sbr.rel (%p84) target = $region20
        $region19: #{tpu_custom_call.1} parent=15 // pred_region
          %s87 = sand.u32 %s23, 1
          %s88 = scalar_lea.sflag [#allocation3], %s87
          %s89 = sand.u32 %s23, 1
          %s90 = smul.addr %s89, 8
          %s91 = scalar_lea.vmem [#allocation2], %s90
          %93 = vsyncadd %s88, 0
          %s94 = smul.addr %s13, 2
          %s95 = smul.addr %s94, 4
          %s96 = scalar_lea.hbm %s0, %s95
          %s98 = sshll.u32 %s96, 4
          %s99 = int_to_ptr.hbm [resolvable:$true] %s98
          %s100 = sshll.u32 %s91, 4
          %s101 = int_to_ptr.vmem [resolvable:$true] %s100
          %103 = dma.hbm_to_vmem [thread:$0]  %s99, 128, %s101, %s88
        $region20: #{tpu_custom_call.1} parent=15 // pred_fallthru
          _
      $region16: #{tpu_custom_call.1} parent=5 // pred_fallthru
        _
      %p104 = scmp.le.s32.totalorder 1, %s13
      %p105 = scmp.lt.s32.totalorder %s13, 3
      %p106 = pnand %p104, %p105
      %p107 = pneg %p106
      // Predicated region
      $region21: #{tpu_custom_call.1} parent=5 // pred_check
        _
      $region22: #{tpu_custom_call.1} parent=5 // pred_check_branch
        %109 = sbr.rel (%p106) target = $region24
      $region23: #{tpu_custom_call.1} parent=5 // pred_region
        %s110 = ssub.s32 %s13, 1
        %s111 = sand.u32 %s26, 1
        %s112 = scalar_lea.sflag [#allocation3], %s111
        %s113 = sand.u32 %s26, 1
        %s114 = smul.addr %s113, 8
        %s115 = scalar_lea.vmem [#allocation2], %s114
        // Predicated region
        $region25: #{tpu_custom_call.1} parent=23 // pred_check
          %p116 = pneg %p39
        $region26: #{tpu_custom_call.1} parent=23 // pred_check_branch
          %118 = sbr.rel (%p116) target = $region28
        $region27: #{tpu_custom_call.1} parent=23 // pred_region
          %120 = dma.done %s112, 128
        $region28: #{tpu_custom_call.1} parent=23 // pred_fallthru
          _
        %s121 = sand.u32 %s26, 1
        %s122 = scalar_lea.sflag [#allocation3], %s121
        %s123 = sand.u32 %s26, 1
        %s124 = smul.addr %s123, 8
        %s125 = scalar_lea.vmem [#allocation2], %s124
        %p126 = pneg %p39
        %p127 = pneg %p36
        %p128 = pneg %p65
        %p129 = pneg %p62
        %s130 = sand.u32 %s52, 1
        %s131 = scalar_lea.sflag [#allocation4], %s130
        %s132 = sand.u32 %s52, 1
        %s133 = smul.addr %s132, 8
        %s134 = scalar_lea.vmem [#allocation5], %s133
        %v135 = vld [vmem:[%s115] sm:$0xff]
        %137 = vst [vmem:[#allocation1] ss:$2 sm:$0xff] %v135
        %v138 = vld.sshfl [vmem:[#allocation1] sm:$0xff pattern:$0x75316420]
        %v139 = vld.sshfl [vmem:[#allocation1 + $0x8] sm:$0xff pattern:$0x75316420]
        %vm142 = vcmask 1043456
        %v143 = vsel %vm142, %v138, 0.0
        %v144 = vsel %vm142, %v139, 0.0
        %v145 = vadd.f32 %v143, %v144
        %146 = vadd.xlane.f32.xlu0 %v145
        %v147 = vpop.xlane.xlu0 %146
        %v148 = vrcp.pop 256.0
        %v149 = vmul.f32 256.0, %v148
        %v150 = vsub.f32 1.0, %v149
        %v151 = vmul.f32 %v148, %v150
        %v152 = vadd.f32 %v148, %v151
        %vm153 = vweird.f32 %v148
        %v154 = vsel %vm153, %v148, %v152
        %v155 = vmul.f32 %v147, %v154
        %v156 = vsel %vm142, %v155, -inf
        %v157 = vrot.slane %v156, 4
        %v158 = vmax.f32 %v156, %v157
        %v159 = vrot.slane %v158, 2
        %v160 = vmax.f32 %v158, %v159
        %v161 = vrot.slane %v160, 1
        %v162 = vmax.f32 %v160, %v161
        %v163 = vsub.f32 %v155, %v162
        %v164 = vmul.f32 %v163, 1.442695
        %v165 = vpow.pop %v164
        %v166 = vsel %vm142, %v165, 0.0
        %v167 = vrot.slane %v166, 4
        %v168 = vadd.f32 %v166, %v167
        %v169 = vrot.slane %v168, 2
        %v170 = vadd.f32 %v168, %v169
        %v171 = vrot.slane %v170, 1
        %v172 = vadd.f32 %v170, %v171
        %v173 = vrcp.pop %v172
        %v174 = vmul.f32 %v172, %v173
        %v175 = vsub.f32 1.0, %v174
        %v176 = vmul.f32 %v173, %v175
        %v177 = vadd.f32 %v173, %v176
        %vm178 = vweird.f32 %v172
        %vm179 = vweird.f32 %v173
        %vm180 = vmor %vm178, %vm179
        %v181 = vsel %vm180, %v173, %v177
        %v182 = vand.u32 2147483647, %v172
        %vm183 = vcmp.eq.f32.partialorder %v182, 8.507059e+37
        %v184 = vand.u32 %v172, 2147483648
        %v185 = vor.u32 1.1754944e-38, %v184
        %v186 = vsel %vm183, %v185, %v181
        %v187 = vmul.f32 %v165, %v186
        %188 = vst [vmem:[#allocation1] ss:$2 sm:$0xff] %v135
        %v189 = vld.sshfl [vmem:[#allocation1] sm:$0xff pattern:$0x75316420]
        %v190 = vld.sshfl [vmem:[#allocation1 + $0x8] sm:$0xff pattern:$0x75316420]
        %v193 = vsel %vm142, %v189, -inf
        %v194 = vsel %vm142, %v190, -inf
        %v195 = vmax.f32 %v193, %v194
        %196 = vmax.xlane.f32.xlu0 %v195
        %v197 = vpop.xlane.xlu0 %196
        %v200 = vunpack.c.l.s4 839922192
        %v201 = vunpack.c.0.s8 %v200
        %v202 = vperm.slane %v197, %v201
        %v204 = vsub.f32 %v135, %v202
        %v205 = vmul.f32 %v204, 1.442695
        %v206 = vpow.pop %v205
        %208 = vst [vmem:[#allocation1] ss:$2 sm:$0xff] %v206
        %v209 = vld.sshfl [vmem:[#allocation1] sm:$0xff pattern:$0x75316420]
        %v210 = vld.sshfl [vmem:[#allocation1 + $0x8] sm:$0xff pattern:$0x75316420]
        %v213 = vsel %vm142, %v209, 0.0
        %v214 = vsel %vm142, %v210, 0.0
        %v215 = vadd.f32 %v213, %v214
        %216 = vadd.xlane.f32.xlu0 %v215
        %v217 = vpop.xlane.xlu0 %216
        %v218 = vrcp.pop %v217
        %v219 = vmul.f32 %v217, %v218
        %v220 = vsub.f32 1.0, %v219
        %v221 = vmul.f32 %v218, %v220
        %v222 = vadd.f32 %v218, %v221
        %vm223 = vweird.f32 %v217
        %vm224 = vweird.f32 %v218
        %vm225 = vmor %vm223, %vm224
        %v226 = vsel %vm225, %v218, %v222
        %v227 = vand.u32 2147483647, %v217
        %vm228 = vcmp.eq.f32.partialorder %v227, 8.507059e+37
        %v229 = vand.u32 %v217, 2147483648
        %v230 = vor.u32 1.1754944e-38, %v229
        %v231 = vsel %vm228, %v230, %v226
        %v232 = vmul.f32 %v187, %v231
        %v235 = vunpack.c.l.s4 839922192
        %v236 = vunpack.c.0.s8 %v235
        %v237 = vperm.slane %v232, %v236
        %v239 = vmul.f32 %v206, %v237
        %240 = vst [vmem:[%s134] sm:$0xff] %v239
        %s241 = sand.u32 %s52, 1
        %s242 = scalar_lea.sflag [#allocation4], %s241
        %s243 = sand.u32 %s52, 1
        %s244 = smul.addr %s243, 8
        %s245 = scalar_lea.vmem [#allocation5], %s244
        // Predicated region
        $region29: #{tpu_custom_call.1} parent=23 // pred_check
          %p246 = pneg %p62
        $region30: #{tpu_custom_call.1} parent=23 // pred_check_branch
          %248 = sbr.rel (%p246) target = $region32
        $region31: #{tpu_custom_call.1} parent=23 // pred_region
          %250 = vsyncadd %s242, 0
          %s251 = smul.addr %s18, 2
          %s252 = smul.addr %s251, 4
          %s253 = scalar_lea.hbm %s1, %s252
          %s255 = sshll.u32 %s245, 4
          %s256 = int_to_ptr.vmem [resolvable:$true] %s255
          %s257 = sshll.u32 %s253, 4
          %s258 = int_to_ptr.hbm [resolvable:$true] %s257
          %260 = dma.vmem_to_hbm [thread:$0]  %s256, 128, %s258, %s242
        $region32: #{tpu_custom_call.1} parent=23 // pred_fallthru
          _
      $region24: #{tpu_custom_call.1} parent=5 // pred_fallthru
        _
      %p261 = scmp.le.s32.totalorder 2, %s13
      // Predicated region
      $region33: #{tpu_custom_call.1} parent=5 // pred_check
        %p262 = pneg %p261
      $region34: #{tpu_custom_call.1} parent=5 // pred_check_branch
        %264 = sbr.rel (%p262) target = $region36
      $region35: #{tpu_custom_call.1} parent=5 // pred_region
        %s265 = ssub.s32 %s13, 2
        // Predicated region
        $region37: #{tpu_custom_call.1} parent=35 // pred_check
          %p266 = pneg %p68
        $region38: #{tpu_custom_call.1} parent=35 // pred_check_branch
          %268 = sbr.rel (%p266) target = $region40
        $region39: #{tpu_custom_call.1} parent=35 // pred_region
          %s269 = sand.u32 %s53, 1
          %s270 = scalar_lea.sflag [#allocation4], %s269
          %s271 = sand.u32 %s53, 1
          %s272 = smul.addr %s271, 8
          %s273 = scalar_lea.vmem [#allocation5], %s272
          %275 = dma.done %s270, 128
        $region40: #{tpu_custom_call.1} parent=35 // pred_fallthru
          _
      $region36: #{tpu_custom_call.1} parent=5 // pred_fallthru
        _
    $region6: #{tpu_custom_call.1} parent=1 // loop_footer
      %s17 = sadd.s32 1, %s13
    $region7: #{tpu_custom_call.1} parent=1 // loop_footer_branch
      %12 = sbr.rel target = $region3
    $region8: #{tpu_custom_call.1} parent=1 // loop_exit
      _
    %276 = vsyncpa [#allocation3], 1
    %s277 = scalar_lea.sflag [#allocation3], 1
    %278 = vsyncpa %s277, 1
    %279 = vsyncpa [#allocation4], 1
    %s280 = scalar_lea.sflag [#allocation4], 1
    %281 = vsyncpa %s280, 1

</llo_original>
